<compile_context>
chip_gen: v7x
topology: tpu7x:2x2x1
jax: 0.10.0
libtpu: 0.0.40
codegen_flags: <defaults>
</compile_context>

<pallas_src>
import jax
import jax.numpy as jnp
from jax.experimental import pallas as pl
from jax.experimental.pallas import tpu as pltpu


def _bouncing_ball_deriv_kernel(gravity_ref, vel_ref,
                                dpos_ref, dvel_ref, dlogr_ref):
    # dpos = vel  (elementwise copy, VPU)
    dpos_ref[...] = vel_ref[...]
    # dvel = -gravity : negate on the scalar path, then splat the tile.
    neg_g = -gravity_ref[0]
    dvel_ref[...] = jnp.full(dvel_ref.shape, neg_g, dvel_ref.dtype)
    # dlog_radius = zeros_like(log_radius): pure constant, built from the
    # output ref's shape (log_radius itself is never loaded).
    dlogr_ref[...] = jnp.zeros(dlogr_ref.shape, dlogr_ref.dtype)


def _pick_tile_rows(B, N, dtype_bytes=4, vmem_budget_bytes=8 << 20):
    """Rows per block: 4 streams x 2 buffers x TILE_B x N x 4B <= budget."""
    if B <= 8 or B % 8 != 0:
        return B  # full extent is always a legal block shape
    per_row = 4 * 2 * N * dtype_bytes
    tile = max(8, (vmem_budget_bytes // per_row) // 8 * 8)
    return min(tile, B)


def bouncing_ball_forward(t, state, gravity):
    """Pallas equivalent of BouncingBallExample.forward.

    Args:
      t: scalar time (unused by the derivative, kept for API parity).
      state: tuple (pos, vel, log_radius), each f32 of shape (B, N).
      gravity: f32 array of shape (1,).
    Returns:
      (dpos, dvel, dlog_radius), each f32 of shape (B, N).
    """
    del t  # forward() does not depend on t
    pos, vel, log_radius = state
    del pos, log_radius  # never read; only their (identical) shape matters

    B, N = vel.shape
    tile_b = _pick_tile_rows(B, N)
    grid = (pl.cdiv(B, tile_b),)

    tile_spec = pl.BlockSpec((tile_b, N), lambda i: (i, 0))
    out_sds = jax.ShapeDtypeStruct((B, N), vel.dtype)

    return pl.pallas_call(
        _bouncing_ball_deriv_kernel,
        out_shape=(out_sds, out_sds, out_sds),
        grid=grid,
        in_specs=[
            pl.BlockSpec(memory_space=pltpu.SMEM),  # gravity scalar (1,)
            tile_spec,                               # vel
        ],
        out_specs=(tile_spec, tile_spec, tile_spec),
        compiler_params=pltpu.CompilerParams(
            dimension_semantics=("parallel",)),
    )(gravity, vel)


class BouncingBallExampleJAX:
    """Deterministic JAX/Pallas port of the PyTorch module's parameters + forward."""

    def __init__(self, radius=0.2, gravity=9.8):
        self.gravity = jnp.array([gravity], dtype=jnp.float32)          # (1,) in SMEM
        self.log_radius = jnp.log(jnp.array([radius], dtype=jnp.float32))
        self.t0 = jnp.array([0.0], dtype=jnp.float32)
        self.init_pos = jnp.array([10.0], dtype=jnp.float32)
        self.init_vel = jnp.array([0.0], dtype=jnp.float32)
        self.absorption = jnp.array([0.2], dtype=jnp.float32)
        # TODO(synk): odeint / odeint_event solver loops (get_collision_times,
        # simulate) are adaptive host-driven control flow with no clean Pallas
        # equivalent; only the forward() derivative hot path is a kernel.

    def forward(self, t, state):
        return bouncing_ball_forward(t, state, self.gravity)

    def event_fn(self, t, state):
        pos, _, log_radius = state
        return pos - jnp.exp(log_radius)

    def get_initial_state(self):
        return (self.t0, (self.init_pos, self.init_vel, self.log_radius))

    def state_update(self, state):
        pos, vel, log_radius = state
        pos = pos + 1e-07
        vel = -vel * (1.0 - self.absorption[0])
        return (pos, vel, log_radius)


if __name__ == "__main__":
    key = jax.random.PRNGKey(0)
    k1, k2, k3 = jax.random.split(key, 3)

    B, N = 8, 256  # (sublane, lane) tile of independent ball states; N % 128 == 0
    pos = jax.random.uniform(k1, (B, N), dtype=jnp.float32, minval=0.5, maxval=10.0)
    vel = jax.random.normal(k2, (B, N), dtype=jnp.float32)
    log_radius = jnp.log(
        jax.random.uniform(k3, (B, N), dtype=jnp.float32, minval=0.1, maxval=0.5))

    model = BouncingBallExampleJAX(radius=0.2, gravity=9.8)
    t = jnp.float32(0.0)

    dpos, dvel, dlogr = model.forward(t, (pos, vel, log_radius))
    jax.block_until_ready((dpos, dvel, dlogr))

    # Reference check against plain JAX semantics of the PyTorch forward.
    assert jnp.allclose(dpos, vel)
    assert jnp.allclose(dvel, jnp.full((B, N), -9.8, dtype=jnp.float32))
    assert jnp.allclose(dlogr, jnp.zeros((B, N), dtype=jnp.float32))

    print("KERNEL_OK")
</pallas_src>

<mosaic_0001>
module attributes {stable_mosaic.version = 11 : i64} {
  func.func @_bouncing_ball_deriv_kernel(%arg0: i32, %arg1: memref<1xf32, #tpu.memory_space<smem>>, %arg2: memref<8x256xf32, #tpu.memory_space<vmem>>, %arg3: memref<8x256xf32, #tpu.memory_space<vmem>>, %arg4: memref<8x256xf32, #tpu.memory_space<vmem>>, %arg5: memref<8x256xf32, #tpu.memory_space<vmem>>) attributes {dimension_semantics = [#tpu.dimension_semantics<parallel>], iteration_bounds = array<i64: 1>, scalar_prefetch = 0 : i64, scratch_operands = 0 : i64, tpu.core_type = #tpu.core_type<tc>, window_params = [{transform_indices = @transform_0, window_bounds = array<i64: 1>}, {transform_indices = @transform_1, window_bounds = array<i64: 8, 256>}, {transform_indices = @transform_2, window_bounds = array<i64: 8, 256>}, {transform_indices = @transform_3, window_bounds = array<i64: 8, 256>}, {transform_indices = @transform_4, window_bounds = array<i64: 8, 256>}]} {
    %c0 = arith.constant 0 : index
    %c0_0 = arith.constant 0 : index
    %0 = vector.load %arg2[%c0, %c0_0] : memref<8x256xf32, #tpu.memory_space<vmem>>, vector<8x256xf32>
    %c0_1 = arith.constant 0 : index
    %c0_2 = arith.constant 0 : index
    %1 = vector.load %arg3[%c0_1, %c0_2] : memref<8x256xf32, #tpu.memory_space<vmem>>, vector<8x256xf32>
    tpu.vector_store %arg3[%c0_1, %c0_2], %0 {strides = array<i32>} : memref<8x256xf32, #tpu.memory_space<vmem>>, vector<8x256xf32>,
    %c0_3 = arith.constant 0 : index
    %2 = memref.load %arg1[%c0_3] : memref<1xf32, #tpu.memory_space<smem>>
    %cst = arith.constant 0.000000e+00 : f32
    %3 = arith.subf %cst, %2 : f32
    %4 = vector.broadcast %3 : f32 to vector<8x256xf32>
    %c0_4 = arith.constant 0 : index
    %c0_5 = arith.constant 0 : index
    %5 = vector.load %arg4[%c0_4, %c0_5] : memref<8x256xf32, #tpu.memory_space<vmem>>, vector<8x256xf32>
    tpu.vector_store %arg4[%c0_4, %c0_5], %4 {strides = array<i32>} : memref<8x256xf32, #tpu.memory_space<vmem>>, vector<8x256xf32>,
    %cst_6 = arith.constant 0.000000e+00 : f32
    %6 = vector.broadcast %cst_6 : f32 to vector<8x256xf32>
    %c0_7 = arith.constant 0 : index
    %c0_8 = arith.constant 0 : index
    %7 = vector.load %arg5[%c0_7, %c0_8] : memref<8x256xf32, #tpu.memory_space<vmem>>, vector<8x256xf32>
    tpu.vector_store %arg5[%c0_7, %c0_8], %6 {strides = array<i32>} : memref<8x256xf32, #tpu.memory_space<vmem>>, vector<8x256xf32>,
    return
  }
  func.func @transform_0(%arg0: i32) -> i32 {
    %c0_i32 = arith.constant 0 : i32
    %c0_i32_0 = arith.constant 0 : i32
    return %c0_i32 : i32
  }
  func.func @transform_1(%arg0: i32) -> (i32, i32) {
    %c0_i32 = arith.constant 0 : i32
    %c0_i32_0 = arith.constant 0 : i32
    return %arg0, %c0_i32 : i32, i32
  }
  func.func @transform_2(%arg0: i32) -> (i32, i32) {
    %c0_i32 = arith.constant 0 : i32
    %c0_i32_0 = arith.constant 0 : i32
    return %arg0, %c0_i32 : i32, i32
  }
  func.func @transform_3(%arg0: i32) -> (i32, i32) {
    %c0_i32 = arith.constant 0 : i32
    %c0_i32_0 = arith.constant 0 : i32
    return %arg0, %c0_i32 : i32, i32
  }
  func.func @transform_4(%arg0: i32) -> (i32, i32) {
    %c0_i32 = arith.constant 0 : i32
    %c0_i32_0 = arith.constant 0 : i32
    return %arg0, %c0_i32 : i32, i32
  }
}

</mosaic_0001>

<llo_original>
// kernel: tpu_custom_call.1
$region0: #{tpu_custom_call.1}
  #allocation0 [shape = 'u32[]', space=smem, size = 0x4, offset = 0x4, fixed_abs, tag = 'smem constant byte address 0x4 - core index']
  #allocation1 [shape = 'u32[144,128]{1,0:T(1,128)}', space=vmem, size = 0x12000, scoped, tag = 'internal scratch']
  #allocation2 [shape = 'f32[1]{0:T(128)S(6)}', space=smem, size = 0x200, scoped, tag = 'scoped memory for tpu_custom_call.1']
  %s0 = inlined_call_operand.<no memory space> [shape: f32[1], index: 0, kind: input, shape index: {}]
  %s1 = inlined_call_operand.hbm [shape: f32[8,256], index: 1, kind: input, shape index: {}]
  %s2 = inlined_call_operand.hbm [shape: f32[8,256], index: 2, kind: output, shape index: {0}]
  %s3 = inlined_call_operand.hbm [shape: f32[8,256], index: 3, kind: output, shape index: {1}]
  %s4 = inlined_call_operand.hbm [shape: f32[8,256], index: 4, kind: output, shape index: {2}]
  %5 = xla_tuple %s2, %s3, %s4
  %s6 = sld [smem:[#allocation0]]
  $region38: #{tpu_custom_call.1} parent=0
    _
  %s8 = ssub.s32 1, %s6
  %s9 = scalar_select 0, %s8, %s6
  %10 = sst [smem:[#allocation2]] %s0
  $region1: #{tpu_custom_call.1} parent=0
    #allocation3 [shape = 'u8[8192]{0}', space=vmem, size = 0x2000, scoped, tag = 'input window, operand 1, single buffered']
    #allocation4 [shape = 's32[1]{0}', space=sflag, size = 0x4, scoped, tag = 'scoped memory for tpu_custom_call.1']
    #allocation5 [shape = 's32[1]{0}', space=sflag, size = 0x4, scoped, tag = 'scoped memory for tpu_custom_call.1']
    #allocation6 [shape = 'u8[8192]{0}', space=vmem, size = 0x2000, scoped, tag = 'output window, operand 0, single buffered']
    #allocation7 [shape = 'u8[8192]{0}', space=vmem, size = 0x2000, scoped, tag = 'output window, operand 1, single buffered']
    #allocation8 [shape = 's32[1]{0}', space=sflag, size = 0x4, scoped, tag = 'scoped memory for tpu_custom_call.1']
    #allocation9 [shape = 'u8[8192]{0}', space=vmem, size = 0x2000, scoped, tag = 'output window, operand 2, single buffered']
    %11 = vsyncpa [#allocation4], 0
    %12 = vsyncpa [#allocation5], 0
    %13 = vsyncpa [#allocation8], 0
    // Predicated region
    $region2: #{tpu_custom_call.1} parent=1 // pred_check
      _
    $region3: #{tpu_custom_call.1} parent=1 // pred_check_branch
      %15 = sbr.rel (0) target = $region5
    $region4: #{tpu_custom_call.1} parent=1 // pred_region
      _
    $region5: #{tpu_custom_call.1} parent=1 // pred_fallthru
      _
    // Predicated region
    $region6: #{tpu_custom_call.1} parent=1 // pred_check
      _
    $region7: #{tpu_custom_call.1} parent=1 // pred_check_branch
      %17 = sbr.rel (0) target = $region9
    $region8: #{tpu_custom_call.1} parent=1 // pred_region
      %s19 = ssub.s32 256, 256
      %20 = vsyncadd [#allocation4], %s19
      %s22 = sshll.u32 [#allocation3], 4
      %s23 = int_to_ptr.vmem [resolvable:$true] %s22
      %25 = dma.hbm_to_vmem [thread:$0]  %s1, 256, %s23, [#allocation4]
    $region9: #{tpu_custom_call.1} parent=1 // pred_fallthru
      _
    // Predicated region
    $region10: #{tpu_custom_call.1} parent=1 // pred_check
      _
    $region11: #{tpu_custom_call.1} parent=1 // pred_check_branch
      %27 = sbr.rel (0) target = $region13
    $region12: #{tpu_custom_call.1} parent=1 // pred_region
      %28 = dma.done [#allocation4], 256
    $region13: #{tpu_custom_call.1} parent=1 // pred_fallthru
      _
    %v29 = vld [vmem:[#allocation3] sm:$0xff]
    %v30 = vld [vmem:[#allocation3 + $0x8] sm:$0xff]
    %31 = vst [vmem:[#allocation6] sm:$0xff] %v29
    %32 = vst [vmem:[#allocation6 + $0x8] sm:$0xff] %v30
    %s33 = sld [smem:[#allocation2]]
    %s34 = ssub.f32 0.0, %s33
    %v35 = vstv %s34
    %36 = vst [vmem:[#allocation7] sm:$0xff] %v35
    %37 = vst [vmem:[#allocation7 + $0x8] sm:$0xff] %v35
    %38 = vst [vmem:[#allocation9] sm:$0xff] 0.0
    %39 = vst [vmem:[#allocation9 + $0x8] sm:$0xff] 0.0
    // Predicated region
    $region14: #{tpu_custom_call.1} parent=1 // pred_check
      _
    $region15: #{tpu_custom_call.1} parent=1 // pred_check_branch
      %41 = sbr.rel (0) target = $region17
    $region16: #{tpu_custom_call.1} parent=1 // pred_region
      %s43 = ssub.s32 256, 256
      %44 = vsyncadd [#allocation5], %s43
      %s46 = sshll.u32 [#allocation6], 4
      %s47 = int_to_ptr.vmem [resolvable:$true] %s46
      %49 = dma.vmem_to_hbm [thread:$0]  %s47, 256, %s2, [#allocation5]
    $region17: #{tpu_custom_call.1} parent=1 // pred_fallthru
      _
    // Predicated region
    $region18: #{tpu_custom_call.1} parent=1 // pred_check
      _
    $region19: #{tpu_custom_call.1} parent=1 // pred_check_branch
      %51 = sbr.rel (0) target = $region21
    $region20: #{tpu_custom_call.1} parent=1 // pred_region
      %s53 = ssub.s32 256, 256
      %54 = vsyncadd [#allocation8], %s53
      %s56 = sshll.u32 [#allocation7], 4
      %s57 = int_to_ptr.vmem [resolvable:$true] %s56
      %59 = dma.vmem_to_hbm [thread:$0]  %s57, 256, %s3, [#allocation8]
    $region21: #{tpu_custom_call.1} parent=1 // pred_fallthru
      _
    // Predicated region
    $region22: #{tpu_custom_call.1} parent=1 // pred_check
      _
    $region23: #{tpu_custom_call.1} parent=1 // pred_check_branch
      %61 = sbr.rel (0) target = $region25
    $region24: #{tpu_custom_call.1} parent=1 // pred_region
      %s63 = ssub.s32 256, 256
      %64 = vsyncadd [#allocation8], %s63
      %s66 = sshll.u32 [#allocation9], 4
      %s67 = int_to_ptr.vmem [resolvable:$true] %s66
      %69 = dma.vmem_to_hbm [thread:$0]  %s67, 256, %s4, [#allocation8]
    $region25: #{tpu_custom_call.1} parent=1 // pred_fallthru
      _
    // Predicated region
    $region26: #{tpu_custom_call.1} parent=1 // pred_check
      _
    $region27: #{tpu_custom_call.1} parent=1 // pred_check_branch
      %71 = sbr.rel (0) target = $region29
    $region28: #{tpu_custom_call.1} parent=1 // pred_region
      %72 = dma.done [#allocation5], 256
    $region29: #{tpu_custom_call.1} parent=1 // pred_fallthru
      _
    // Predicated region
    $region30: #{tpu_custom_call.1} parent=1 // pred_check
      _
    $region31: #{tpu_custom_call.1} parent=1 // pred_check_branch
      %74 = sbr.rel (0) target = $region33
    $region32: #{tpu_custom_call.1} parent=1 // pred_region
      %75 = dma.done [#allocation8], 256
    $region33: #{tpu_custom_call.1} parent=1 // pred_fallthru
      _
    // Predicated region
    $region34: #{tpu_custom_call.1} parent=1 // pred_check
      _
    $region35: #{tpu_custom_call.1} parent=1 // pred_check_branch
      %77 = sbr.rel (0) target = $region37
    $region36: #{tpu_custom_call.1} parent=1 // pred_region
      %78 = dma.done [#allocation8], 256
    $region37: #{tpu_custom_call.1} parent=1 // pred_fallthru
      _
    %79 = vsyncpa [#allocation4], 1
    %80 = vsyncpa [#allocation5], 1
    %81 = vsyncpa [#allocation8], 1

</llo_original>
